<compile_context>
chip_gen: v7x
topology: tpu7x:2x2x1
jax: 0.10.0
libtpu: 0.0.40
codegen_flags: <defaults>
</compile_context>

<pallas_src>
import functools

import jax
import jax.numpy as jnp
from jax.experimental import pallas as pl
from jax.experimental.pallas import tpu as pltpu


_LANE = 512          # lane width: multiple of 128 -> unmasked full-width stores
_TM_MAX = 1024       # max rows per tile; f32 tile = 1024*512*4B = 2 MiB per buffer


def _round_up(x, m):
    return (x + m - 1) // m * m


def _leaky_relu_kernel(x_ref, o_ref, *, slope):
    x = x_ref[...]
    # Exact semantics of torch.where(x > 0, x, slope * x); single VPU select.
    o_ref[...] = jnp.where(x > 0, x, slope * x)


def leaky_relu(x, negative_slope: float = 0.01):
    """Elementwise LeakyReLU on an arbitrary-shaped float tensor via Pallas."""
    orig_shape = x.shape
    total = x.size
    if total == 0:
        return x

    # Flatten and view as a lane-dense (rows, _LANE) slab.
    rows = pl.cdiv(total, _LANE)
    tm = min(_TM_MAX, _round_up(rows, 16))     # multiple of 16: safe for f32/bf16 tiling
    rows_p = _round_up(rows, tm)
    grid_m = rows_p // tm
    padded = rows_p * _LANE

    xf = x.reshape(-1)
    if padded != total:
        xf = jnp.pad(xf, (0, padded - total))
    xf = xf.reshape(rows_p, _LANE)

    # VMEM budget from the actual footprint (in + out, double-buffered) + headroom.
    tile_bytes = tm * _LANE * x.dtype.itemsize
    vmem_limit = min(max(8 * tile_bytes, 16 * 1024 * 1024), 48 * 1024 * 1024)

    out = pl.pallas_call(
        functools.partial(_leaky_relu_kernel, slope=negative_slope),
        grid=(grid_m,),
        in_specs=[pl.BlockSpec((tm, _LANE), lambda i: (i, 0))],
        out_specs=pl.BlockSpec((tm, _LANE), lambda i: (i, 0)),
        out_shape=jax.ShapeDtypeStruct((rows_p, _LANE), x.dtype),
        compiler_params=pltpu.CompilerParams(
            dimension_semantics=("parallel",),   # shards rows across v7x's 2 TCs
            vmem_limit_bytes=vmem_limit),
    )(xf)

    return out.reshape(-1)[:total].reshape(orig_shape)


class LeakyReLU:
    """Mirror of the PyTorch module: forward(x) = where(x > 0, x, slope * x)."""

    def __init__(self, negative_slope: float = 0.01):
        self.negative_slope = negative_slope

    def __call__(self, x):
        return leaky_relu(x, self.negative_slope)

    def extra_repr(self) -> str:
        return f"negative_slope={self.negative_slope}"


if __name__ == "__main__":
    key = jax.random.PRNGKey(0)

    # Small shape consistent with the module's usage (activations of an image net).
    key, k1 = jax.random.split(key)
    x = jax.random.normal(k1, (2, 4, 16, 16), jnp.float32)

    mod = LeakyReLU()                      # default negative_slope = 0.01
    fwd = jax.jit(mod)
    y = jax.block_until_ready(fwd(x))

    ref = jnp.where(x > 0, x, mod.negative_slope * x)
    assert y.shape == x.shape and y.dtype == x.dtype
    assert bool(jnp.allclose(y, ref, atol=0.0, rtol=0.0)), "mismatch vs reference"

    # Larger shape: exercises grid_m > 1 (tiling + megacore path) and a custom slope.
    key, k2 = jax.random.split(key)
    x2 = jax.random.normal(k2, (2048, 1030), jnp.float32)   # non-multiple of lane width
    y2 = jax.block_until_ready(jax.jit(lambda a: leaky_relu(a, 0.2))(x2))
    ref2 = jnp.where(x2 > 0, x2, 0.2 * x2)
    assert bool(jnp.allclose(y2, ref2, atol=0.0, rtol=0.0)), "mismatch vs reference (large)"
    assert bool(jnp.all(jnp.isfinite(y2)))

    print("KERNEL_OK")
</pallas_src>

<mosaic_0001>
module attributes {stable_mosaic.version = 11 : i64} {
  func.func @_leaky_relu_kernel(%arg0: i32, %arg1: memref<16x512xf32, #tpu.memory_space<vmem>>, %arg2: memref<16x512xf32, #tpu.memory_space<vmem>>) attributes {dimension_semantics = [#tpu.dimension_semantics<parallel>], iteration_bounds = array<i64: 1>, scalar_prefetch = 0 : i64, scratch_operands = 0 : i64, tpu.core_type = #tpu.core_type<tc>, window_params = [{transform_indices = @transform_0, window_bounds = array<i64: 16, 512>}, {transform_indices = @transform_1, window_bounds = array<i64: 16, 512>}]} {
    %c0 = arith.constant 0 : index
    %c0_0 = arith.constant 0 : index
    %0 = vector.load %arg1[%c0, %c0_0] : memref<16x512xf32, #tpu.memory_space<vmem>>, vector<16x512xf32>
    %cst = arith.constant 0.000000e+00 : f32
    %1 = vector.broadcast %cst : f32 to vector<16x512xf32>
    %2 = arith.cmpf ogt, %0, %1 : vector<16x512xf32>
    %cst_1 = arith.constant 0.00999999977 : f32
    %3 = vector.broadcast %cst_1 : f32 to vector<16x512xf32>
    %4 = arith.mulf %3, %0 : vector<16x512xf32>
    %5 = arith.select %2, %0, %4 : vector<16x512xi1>, vector<16x512xf32>
    %c0_2 = arith.constant 0 : index
    %c0_3 = arith.constant 0 : index
    %6 = vector.load %arg2[%c0_2, %c0_3] : memref<16x512xf32, #tpu.memory_space<vmem>>, vector<16x512xf32>
    tpu.vector_store %arg2[%c0_2, %c0_3], %5 {strides = array<i32>} : memref<16x512xf32, #tpu.memory_space<vmem>>, vector<16x512xf32>,
    return
  }
  func.func @transform_0(%arg0: i32) -> (i32, i32) {
    %c0_i32 = arith.constant 0 : i32
    %c0_i32_0 = arith.constant 0 : i32
    return %arg0, %c0_i32 : i32, i32
  }
  func.func @transform_1(%arg0: i32) -> (i32, i32) {
    %c0_i32 = arith.constant 0 : i32
    %c0_i32_0 = arith.constant 0 : i32
    return %arg0, %c0_i32 : i32, i32
  }
}

</mosaic_0001>

<llo_original>
// kernel: _unnamed_function_.1
$region0: #{_unnamed_function_.1}
  #allocation0 [shape = 'u32[]', space=smem, size = 0x4, offset = 0x4, fixed_abs, tag = 'smem constant byte address 0x4 - core index']
  #allocation1 [shape = 'u32[144,128]{1,0:T(1,128)}', space=vmem, size = 0x12000, scoped, tag = 'internal scratch']
  %s0 = inlined_call_operand.vmem [shape: f32[16,512], index: 0, kind: input, shape index: {}]
  %s1 = inlined_call_operand.vmem [shape: f32[16,512], index: 1, kind: output, shape index: {}]
  %s2 = sld [smem:[#allocation0]]
  $region14: #{_unnamed_function_.1} parent=0
    _
  %s4 = ssub.s32 1, %s2
  %s5 = scalar_select 0, %s4, %s2
  // Predicated region
  $region2: #{_unnamed_function_.1} parent=0 // pred_check
    _
  $region3: #{_unnamed_function_.1} parent=0 // pred_check_branch
    %7 = sbr.rel (0) target = $region5
  $region4: #{_unnamed_function_.1} parent=0 // pred_region
    _
  $region5: #{_unnamed_function_.1} parent=0 // pred_fallthru
    _
  %v8 = vld [vmem:[%s0] sm:$0xff]
  %v9 = vld [vmem:[%s0 + $0x8] sm:$0xff]
  %v10 = vld [vmem:[%s0 + $0x10] sm:$0xff]
  %v11 = vld [vmem:[%s0 + $0x18] sm:$0xff]
  %v12 = vld [vmem:[%s0 + $0x20] sm:$0xff]
  %v13 = vld [vmem:[%s0 + $0x28] sm:$0xff]
  %v14 = vld [vmem:[%s0 + $0x30] sm:$0xff]
  %v15 = vld [vmem:[%s0 + $0x38] sm:$0xff]
  %vm16 = vcmp.gt.f32.partialorder %v8, 0.0
  %vm17 = vcmp.gt.f32.partialorder %v9, 0.0
  %vm18 = vcmp.gt.f32.partialorder %v10, 0.0
  %vm19 = vcmp.gt.f32.partialorder %v11, 0.0
  %vm20 = vcmp.gt.f32.partialorder %v12, 0.0
  %vm21 = vcmp.gt.f32.partialorder %v13, 0.0
  %vm22 = vcmp.gt.f32.partialorder %v14, 0.0
  %vm23 = vcmp.gt.f32.partialorder %v15, 0.0
  %v24 = vmul.f32 %v8, 0.01
  %v25 = vmul.f32 %v9, 0.01
  %v26 = vmul.f32 %v10, 0.01
  %v27 = vmul.f32 %v11, 0.01
  %v28 = vmul.f32 %v12, 0.01
  %v29 = vmul.f32 %v13, 0.01
  %v30 = vmul.f32 %v14, 0.01
  %v31 = vmul.f32 %v15, 0.01
  %v32 = vsel %vm16, %v8, %v24
  %v33 = vsel %vm17, %v9, %v25
  %v34 = vsel %vm18, %v10, %v26
  %v35 = vsel %vm19, %v11, %v27
  %v36 = vsel %vm20, %v12, %v28
  %v37 = vsel %vm21, %v13, %v29
  %v38 = vsel %vm22, %v14, %v30
  %v39 = vsel %vm23, %v15, %v31
  %40 = vst [vmem:[%s1] sm:$0xff] %v32
  %41 = vst [vmem:[%s1 + $0x8] sm:$0xff] %v33
  %42 = vst [vmem:[%s1 + $0x10] sm:$0xff] %v34
  %43 = vst [vmem:[%s1 + $0x18] sm:$0xff] %v35
  %44 = vst [vmem:[%s1 + $0x20] sm:$0xff] %v36
  %45 = vst [vmem:[%s1 + $0x28] sm:$0xff] %v37
  %46 = vst [vmem:[%s1 + $0x30] sm:$0xff] %v38
  %47 = vst [vmem:[%s1 + $0x38] sm:$0xff] %v39
  // Predicated region
  $region6: #{_unnamed_function_.1} parent=0 // pred_check
    _
  $region7: #{_unnamed_function_.1} parent=0 // pred_check_branch
    %49 = sbr.rel (0) target = $region9
  $region8: #{_unnamed_function_.1} parent=0 // pred_region
    _
  $region9: #{_unnamed_function_.1} parent=0 // pred_fallthru
    _
  // Predicated region
  $region10: #{_unnamed_function_.1} parent=0 // pred_check
    _
  $region11: #{_unnamed_function_.1} parent=0 // pred_check_branch
    %51 = sbr.rel (0) target = $region13
  $region12: #{_unnamed_function_.1} parent=0 // pred_region
    _
  $region13: #{_unnamed_function_.1} parent=0 // pred_fallthru
    _

</llo_original>
